<compile_context>
chip_gen: v7x
topology: tpu7x:2x2x1
jax: 0.10.0
libtpu: 0.0.40
codegen_flags: <defaults>
</compile_context>

<pallas_src>
import functools
import math

import jax
import jax.numpy as jnp
import numpy as np
from jax.experimental import pallas as pl
from jax.experimental.pallas import tpu as pltpu

EMBEDDING_DIM = 32          # must be even and >= 4 here
PADDING_IDX = 1


def _sinpos_kernel(x_ref, tri_ref, freq_ref, o_ref, carry_ref, *, padding_idx):
    # x_ref:     (TB, TS)     int32 token ids
    # tri_ref:   (TS, TS)     bf16 upper-triangular ones (tri[t, s] = 1 iff t <= s)
    # freq_ref:  (half, 1)    f32 inverse frequencies
    # o_ref:     (TB, TS, D)  f32 output block (module's (B, S, D) layout)
    # carry_ref: (TB, 1)      f32 running non-pad count per row, carried across seq tiles
    #
    # NOTE: the carry is only correct because the seq axis is the innermost grid axis and is
    # marked "arbitrary" (scratch persists across its steps; reset at seq step 0 below). Do not
    # reorder the grid or mark the seq axis "parallel".
    @pl.when(pl.program_id(1) == 0)
    def _():
        carry_ref[...] = jnp.zeros_like(carry_ref)

    x = x_ref[...]
    mask_bf = (x != padding_idx).astype(jnp.bfloat16)          # (TB, TS), exactly 0/1
    mask = mask_bf.astype(jnp.float32)

    # Inclusive prefix-sum over this tile's seq axis: one MXU matmul against the constant
    # triangular matrix.  bf16 inputs are exact (0/1), accumulation is f32, so the counts are
    # exact as long as S + padding_idx + 1 < 2^24 (asserted in the wrapper).
    local = jnp.dot(mask_bf, tri_ref[...], preferred_element_type=jnp.float32)   # (TB, TS)

    carry_in = carry_ref[...]                                                    # (TB, 1)
    carry_ref[...] = carry_in + jnp.sum(mask, axis=1, keepdims=True)             # next-tile carry

    pos = (local + carry_in) * mask + float(padding_idx)                         # (TB, TS)

    # Angles in (TB, half, TS): sequence sits in the 128-lane dim, so the sin/cos (EUP) and the
    # masking multiplies (VPU) run on fully dense vregs.
    freq = freq_ref[...]                                       # (half, 1)
    ang = pos[:, None, :] * freq[None, :, :]                   # (TB, half, TS)
    mask_b = mask[:, None, :]                                  # (TB, 1, TS)

    sin_v = jnp.sin(ang) * mask_b                              # weights[padding_idx, :] == 0
    cos_v = jnp.cos(ang) * mask_b
    emb = jnp.concatenate([sin_v, cos_v], axis=1)              # (TB, D, TS)

    # Per-tile (D, TS) -> (TS, D) transpose on the XLU (idle here) + a single store of the whole
    # block: no wrapper-level transpose / extra HBM round trip needed.
    o_ref[...] = jnp.swapaxes(emb, 1, 2).astype(o_ref.dtype)


def _choose_seq_tile(seq_len_padded: int, max_tile: int) -> int:
    # seq_len_padded is a multiple of 128; pick the largest multiple-of-128 divisor <= max_tile.
    best = 128
    t = 128
    while t <= min(seq_len_padded, max_tile):
        if seq_len_padded % t == 0:
            best = t
        t += 128
    return best


def _choose_batch_tile(bsz: int, max_tile: int) -> int:
    if bsz < 8 or bsz % 8 != 0:
        return bsz                       # small / ragged batch: single full-batch tile
    target = min(bsz, max_tile)
    if bsz >= 16:
        target = min(target, bsz // 2)   # nb >= 2 so v7x's two TensorCores both get batch tiles
    target -= target % 8
    for t in range(target, 7, -8):
        if bsz % t == 0:
            return t
    return 8


def sinusoidal_positional_embedding(tokens: jax.Array,
                                    embedding_dim: int = EMBEDDING_DIM,
                                    padding_idx: int = PADDING_IDX,
                                    max_seq_tile: int = 256,
                                    max_batch_tile: int = 32) -> jax.Array:
    """tokens: (bsz, seq_len) int32 -> (bsz, seq_len, embedding_dim) float32."""
    assert embedding_dim % 2 == 0 and embedding_dim >= 4, "need even embedding_dim >= 4"
    B, S = tokens.shape
    D = embedding_dim
    half = D // 2
    assert padding_idx + S + 1 < 2 ** 24, "positions must stay exactly representable in f32"

    # Pad the sequence axis to a multiple of 128 with padding_idx (mask == 0 there, so the
    # running cumsum over real tokens is unchanged); the pad is sliced off below.  This keeps
    # the triangular constant at O(TS^2) for any S (no O(S^2) fallback path).
    S_pad = max(128, ((S + 127) // 128) * 128)
    if S_pad != S:
        tokens_p = jnp.pad(tokens, ((0, 0), (0, S_pad - S)), constant_values=padding_idx)
    else:
        tokens_p = tokens

    TS = _choose_seq_tile(S_pad, max_seq_tile)
    TB = _choose_batch_tile(B, max_batch_tile)
    nb, ns = B // TB, S_pad // TS

    # Small constant inputs (fetched once by the pipeline: their block index never changes).
    scale = math.log(10000.0) / (half - 1)
    inv_freq = jnp.exp(jnp.arange(half, dtype=jnp.float32) * -scale).reshape(half, 1)
    tri = jnp.triu(jnp.ones((TS, TS), jnp.float32)).astype(jnp.bfloat16)  # tri[t,s]=1 iff t<=s

    kernel = functools.partial(_sinpos_kernel, padding_idx=padding_idx)

    out = pl.pallas_call(
        kernel,
        out_shape=jax.ShapeDtypeStruct((B, S_pad, D), jnp.float32),
        grid_spec=pltpu.PrefetchScalarGridSpec(
            num_scalar_prefetch=0,
            grid=(nb, ns),
            in_specs=[
                pl.BlockSpec((TB, TS), lambda b, s: (b, s)),
                pl.BlockSpec((TS, TS), lambda b, s: (0, 0)),   # constant RHS
                pl.BlockSpec((half, 1), lambda b, s: (0, 0)),  # constant inv_freq
            ],
            out_specs=pl.BlockSpec((TB, TS, D), lambda b, s: (b, s, 0)),
            scratch_shapes=[pltpu.VMEM((TB, 1), jnp.float32)],
        ),
        compiler_params=pltpu.CompilerParams(
            # Seq axis must stay innermost + "arbitrary": the per-row carry scratch is a scan
            # over it.  Batch axis is "parallel" so megacore can split it.
            dimension_semantics=("parallel", "arbitrary"),
            vmem_limit_bytes=32 * 1024 * 1024,
        ),
    )(tokens_p, tri, inv_freq)

    return out[:, :S, :] if S_pad != S else out


# ---------------- pure-numpy reference (mirrors the torch module) ----------------
def _ref_get_embedding(num_embeddings, embedding_dim, padding_idx):
    half_dim = embedding_dim // 2
    emb = math.log(10000) / (half_dim - 1)
    emb = np.exp(np.arange(half_dim, dtype=np.float32) * -emb)
    emb = np.arange(num_embeddings, dtype=np.float32)[:, None] * emb[None, :]
    emb = np.concatenate([np.sin(emb), np.cos(emb)], axis=1).reshape(num_embeddings, -1)
    if padding_idx is not None:
        emb[padding_idx, :] = 0
    return emb


def _ref_forward(tokens_np, padding_idx, embedding_dim):
    bsz, seq_len = tokens_np.shape
    max_pos = padding_idx + 1 + seq_len
    weights = _ref_get_embedding(max_pos, embedding_dim, padding_idx)
    mask = (tokens_np != padding_idx).astype(np.int64)
    positions = np.cumsum(mask, axis=1) * mask + padding_idx
    return weights[positions.reshape(-1)].reshape(bsz, seq_len, -1)


if __name__ == "__main__":
    k1, k2 = jax.random.split(jax.random.PRNGKey(0))

    # --- small test (module-scale shapes) ---
    B, S = 2, 8
    tokens = jax.random.randint(k1, (B, S), 2, 20, dtype=jnp.int32)
    tokens = tokens.at[:, 6:].set(PADDING_IDX)            # tail padding
    out = jax.block_until_ready(sinusoidal_positional_embedding(tokens))
    assert out.shape == (B, S, EMBEDDING_DIM)
    ref = _ref_forward(np.asarray(tokens), PADDING_IDX, EMBEDDING_DIM)
    np.testing.assert_allclose(np.asarray(out), ref, rtol=1e-5, atol=1e-5)

    # --- larger test: multiple batch/seq tiles, non-multiple-of-128 S (pad path), carry ---
    B2, S2 = 16, 300
    tokens2 = jax.random.randint(k2, (B2, S2), 2, 20, dtype=jnp.int32)
    tokens2 = tokens2.at[:, 260:].set(PADDING_IDX)         # tail padding
    tokens2 = tokens2.at[:, 50].set(PADDING_IDX)           # interior padding
    out2 = jax.block_until_ready(
        sinusoidal_positional_embedding(tokens2, max_seq_tile=128))   # forces 3 seq tiles
    ref2 = _ref_forward(np.asarray(tokens2), PADDING_IDX, EMBEDDING_DIM)
    np.testing.assert_allclose(np.asarray(out2), ref2, rtol=1e-4, atol=2e-4)

    print("KERNEL_OK")
</pallas_src>

<mosaic_0001>
module attributes {stable_mosaic.version = 11 : i64} {
  func.func @_sinpos_kernel(%arg0: i32, %arg1: i32, %arg2: memref<2x128xi32, #tpu.memory_space<vmem>>, %arg3: memref<128x128xbf16, #tpu.memory_space<vmem>>, %arg4: memref<16x1xf32, #tpu.memory_space<vmem>>, %arg5: memref<2x128x32xf32, #tpu.memory_space<vmem>>, %arg6: memref<2x1xf32, #tpu.memory_space<vmem>>) attributes {dimension_semantics = [#tpu.dimension_semantics<parallel>, #tpu.dimension_semantics<arbitrary>], iteration_bounds = array<i64: 1, 1>, scalar_prefetch = 0 : i64, scratch_operands = 1 : i64, tpu.core_type = #tpu.core_type<tc>, window_params = [{transform_indices = @transform_0, window_bounds = array<i64: 2, 128>}, {pipeline_mode = #tpu.pipeline_mode<synchronous>, transform_indices = @transform_1, window_bounds = array<i64: 128, 128>}, {pipeline_mode = #tpu.pipeline_mode<synchronous>, transform_indices = @transform_2, window_bounds = array<i64: 16, 1>}, {transform_indices = @transform_3, window_bounds = array<i64: 2, 128, 32>}]} {
    %c0_i32 = arith.constant 0 : i32
    %0 = arith.cmpi eq, %arg1, %c0_i32 : i32
    %1 = arith.extui %0 : i1 to i32
    %c0_i32_0 = arith.constant 0 : i32
    %2 = arith.cmpi ne, %1, %c0_i32_0 : i32
    scf.if %2 {
      %cst_15 = arith.constant 0.000000e+00 : f32
      %38 = vector.broadcast %cst_15 : f32 to vector<2x1xf32>
      %c0_16 = arith.constant 0 : index
      %c0_17 = arith.constant 0 : index
      %39 = vector.load %arg6[%c0_16, %c0_17] : memref<2x1xf32, #tpu.memory_space<vmem>>, vector<2x1xf32>
      tpu.vector_store %arg6[%c0_16, %c0_17], %38 {strides = array<i32>} : memref<2x1xf32, #tpu.memory_space<vmem>>, vector<2x1xf32>,
    } else {
    }
    %c0 = arith.constant 0 : index
    %c0_1 = arith.constant 0 : index
    %3 = vector.load %arg2[%c0, %c0_1] : memref<2x128xi32, #tpu.memory_space<vmem>>, vector<2x128xi32>
    %c1_i32 = arith.constant 1 : i32
    %4 = vector.broadcast %c1_i32 : i32 to vector<2x128xi32>
    %5 = arith.cmpi ne, %3, %4 : vector<2x128xi32>
    %6 = arith.extui %5 : vector<2x128xi1> to vector<2x128xi32>
    %7 = arith.sitofp %6 : vector<2x128xi32> to vector<2x128xf32>
    %8 = arith.truncf %7 : vector<2x128xf32> to vector<2x128xbf16>
    %9 = arith.extf %8 : vector<2x128xbf16> to vector<2x128xf32>
    %c0_2 = arith.constant 0 : index
    %c0_3 = arith.constant 0 : index
    %10 = vector.load %arg3[%c0_2, %c0_3] : memref<128x128xbf16, #tpu.memory_space<vmem>>, vector<128x128xbf16>
    %cst = arith.constant dense<0.000000e+00> : vector<2x128xf32>
    %11 = tpu.matmul %8, %10, %cst {dimension_numbers = #tpu.dot_dimension_numbers<[1], [0], [0], [1], [0, 0, 1, 1], [], []>} : vector<2x128xbf16>, vector<128x128xbf16>, vector<2x128xf32> -> vector<2x128xf32>
    %c0_4 = arith.constant 0 : index
    %c0_5 = arith.constant 0 : index
    %12 = vector.load %arg6[%c0_4, %c0_5] : memref<2x1xf32, #tpu.memory_space<vmem>>, vector<2x1xf32>
    %cst_6 = arith.constant dense<0.000000e+00> : vector<2xf32>
    %13 = vector.multi_reduction <add>, %9, %cst_6 [1] : vector<2x128xf32> to vector<2xf32>
    %14 = vector.shape_cast %13 : vector<2xf32> to vector<2x1xf32>
    %15 = arith.addf %12, %14 : vector<2x1xf32>
    %c0_7 = arith.constant 0 : index
    %c0_8 = arith.constant 0 : index
    %16 = vector.load %arg6[%c0_7, %c0_8] : memref<2x1xf32, #tpu.memory_space<vmem>>, vector<2x1xf32>
    tpu.vector_store %arg6[%c0_7, %c0_8], %15 {strides = array<i32>} : memref<2x1xf32, #tpu.memory_space<vmem>>, vector<2x1xf32>,
    %17 = vector.broadcast %12 : vector<2x1xf32> to vector<2x128xf32>
    %18 = arith.addf %11, %17 : vector<2x128xf32>
    %19 = arith.mulf %18, %9 : vector<2x128xf32>
    %cst_9 = arith.constant 1.000000e+00 : f32
    %20 = vector.broadcast %cst_9 : f32 to vector<2x128xf32>
    %21 = arith.addf %19, %20 : vector<2x128xf32>
    %c0_10 = arith.constant 0 : index
    %c0_11 = arith.constant 0 : index
    %22 = vector.load %arg4[%c0_10, %c0_11] : memref<16x1xf32, #tpu.memory_space<vmem>>, vector<16x1xf32>
    %23 = vector.shape_cast %21 : vector<2x128xf32> to vector<2x1x128xf32>
    %24 = vector.shape_cast %22 : vector<16x1xf32> to vector<1x16x1xf32>
    %25 = vector.broadcast %23 : vector<2x1x128xf32> to vector<2x16x128xf32>
    %26 = vector.broadcast %24 : vector<1x16x1xf32> to vector<2x16x128xf32>
    %27 = arith.mulf %25, %26 : vector<2x16x128xf32>
    %28 = vector.shape_cast %9 : vector<2x128xf32> to vector<2x1x128xf32>
    %29 = math.sin %27 : vector<2x16x128xf32>
    %30 = vector.broadcast %28 : vector<2x1x128xf32> to vector<2x16x128xf32>
    %31 = arith.mulf %29, %30 : vector<2x16x128xf32>
    %32 = math.cos %27 : vector<2x16x128xf32>
    %33 = vector.broadcast %28 : vector<2x1x128xf32> to vector<2x16x128xf32>
    %34 = arith.mulf %32, %33 : vector<2x16x128xf32>
    %35 = tpu.concatenate %31, %34 in 1 : vector<2x16x128xf32>, vector<2x16x128xf32> -> vector<2x32x128xf32>
    %36 = tpu.transpose %35, [0, 2, 1] : vector<2x32x128xf32> -> vector<2x128x32xf32>
    %c0_12 = arith.constant 0 : index
    %c0_13 = arith.constant 0 : index
    %c0_14 = arith.constant 0 : index
    %37 = vector.load %arg5[%c0_12, %c0_13, %c0_14] : memref<2x128x32xf32, #tpu.memory_space<vmem>>, vector<2x128x32xf32>
    tpu.vector_store %arg5[%c0_12, %c0_13, %c0_14], %36 {strides = array<i32>} : memref<2x128x32xf32, #tpu.memory_space<vmem>>, vector<2x128x32xf32>,
    return
  }
  func.func @transform_0(%arg0: i32, %arg1: i32) -> (i32, i32) {
    %c0_i32 = arith.constant 0 : i32
    return %arg0, %arg1 : i32, i32
  }
  func.func @transform_1(%arg0: i32, %arg1: i32) -> (i32, i32) {
    %c0_i32 = arith.constant 0 : i32
    %c0_i32_0 = arith.constant 0 : i32
    %c0_i32_1 = arith.constant 0 : i32
    return %c0_i32, %c0_i32_0 : i32, i32
  }
  func.func @transform_2(%arg0: i32, %arg1: i32) -> (i32, i32) {
    %c0_i32 = arith.constant 0 : i32
    %c0_i32_0 = arith.constant 0 : i32
    %c0_i32_1 = arith.constant 0 : i32
    return %c0_i32, %c0_i32_0 : i32, i32
  }
  func.func @transform_3(%arg0: i32, %arg1: i32) -> (i32, i32, i32) {
    %c0_i32 = arith.constant 0 : i32
    %c0_i32_0 = arith.constant 0 : i32
    return %arg0, %arg1, %c0_i32 : i32, i32, i32
  }
}

</mosaic_0001>

<llo_original>
// kernel: tpu_custom_call.1
$region0: #{tpu_custom_call.1}
  #allocation0 [shape = 'u32[]', space=smem, size = 0x4, offset = 0x4, fixed_abs, tag = 'smem constant byte address 0x4 - core index']
  #allocation1 [shape = 'u32[144,128]{1,0:T(1,128)}', space=vmem, size = 0x12000, scoped, tag = 'internal scratch']
  #allocation2 [shape = 'f32[2,1]{1,0:T(2,128)}', space=vmem, size = 0x400, scoped, tag = 'scratch operand']
  %s0 = inlined_call_operand.vmem [shape: s32[2,128], index: 0, kind: input, shape index: {}]
  %s1 = inlined_call_operand.hbm [shape: bf16[128,128], index: 1, kind: input, shape index: {}]
  %s2 = inlined_call_operand.vmem [shape: f32[16,1], index: 2, kind: input, shape index: {}]
  %s3 = inlined_call_operand.vmem [shape: f32[2,128,32], index: 3, kind: output, shape index: {}]
  %s4 = sld [smem:[#allocation0]]
  $region30: #{tpu_custom_call.1} parent=0
    _
  %s6 = ssub.s32 1, %s4
  %s7 = scalar_select 0, %s6, %s4
  $region1: #{tpu_custom_call.1} parent=0
    #allocation3 [shape = 'u8[32768]{0}', space=vmem, size = 0x8000, scoped, tag = 'input window, operand 1, single buffered']
    #allocation4 [shape = 's32[1]{0}', space=sflag, size = 0x4, scoped, tag = 'scoped memory for tpu_custom_call.1']
    %8 = vsyncpa [#allocation4], 0
    // Predicated region
    $region2: #{tpu_custom_call.1} parent=1 // pred_check
      _
    $region3: #{tpu_custom_call.1} parent=1 // pred_check_branch
      %10 = sbr.rel (0) target = $region5
    $region4: #{tpu_custom_call.1} parent=1 // pred_region
      _
    $region5: #{tpu_custom_call.1} parent=1 // pred_fallthru
      _
    // Predicated region
    $region6: #{tpu_custom_call.1} parent=1 // pred_check
      _
    $region7: #{tpu_custom_call.1} parent=1 // pred_check_branch
      %12 = sbr.rel (0) target = $region9
    $region8: #{tpu_custom_call.1} parent=1 // pred_region
      %s14 = ssub.s32 1024, 1024
      %15 = vsyncadd [#allocation4], %s14
      %s16 = sshll.u32 [#allocation3], 4
      %s17 = int_to_ptr.vmem [resolvable:$true] %s16
      %22 = dma.hbm_to_vmem [thread:$0]  %s1, 1024, %s17, [#allocation4], 64, 64, 4
    $region9: #{tpu_custom_call.1} parent=1 // pred_fallthru
      _
    // Predicated region
    $region10: #{tpu_custom_call.1} parent=1 // pred_check
      _
    $region11: #{tpu_custom_call.1} parent=1 // pred_check_branch
      %24 = sbr.rel (0) target = $region13
    $region12: #{tpu_custom_call.1} parent=1 // pred_region
      _
    $region13: #{tpu_custom_call.1} parent=1 // pred_fallthru
      _
    // Predicated region
    $region14: #{tpu_custom_call.1} parent=1 // pred_check
      _
    $region15: #{tpu_custom_call.1} parent=1 // pred_check_branch
      %26 = sbr.rel (0) target = $region17
    $region16: #{tpu_custom_call.1} parent=1 // pred_region
      %27 = dma.done [#allocation4], 1024
    $region17: #{tpu_custom_call.1} parent=1 // pred_fallthru
      _
    %p29 = scmp.eq.s32.totalorder 0, 0
    // Predicated region
    $region18: #{tpu_custom_call.1} parent=1 // pred_check
      %p30 = pneg %p29
    $region19: #{tpu_custom_call.1} parent=1 // pred_check_branch
      %32 = sbr.rel (%p30) target = $region21
    $region20: #{tpu_custom_call.1} parent=1 // pred_region
      %vm33 = vcmask 1024
      %34 = vst.msk [vmem:[#allocation2] sm:$0x3] %vm33, 0.0
    $region21: #{tpu_custom_call.1} parent=1 // pred_fallthru
      _
    %v35 = vld [vmem:[%s0] sm:$0x3]
    %vm36 = vcmp.ne.s32.totalorder %v35, 1
    %v37 = vsel %vm36, 1, 0
    %v38 = vcvt.s32.f32 %v37
    %v39 = vpack.c.bf16 %v38, %v38
    %v40 = vunpack.c.l.bf16 %v39
    %v41 = vld [vmem:[#allocation3] sm:$0xf]
    %v42 = vld [vmem:[#allocation3 + $0x4] sm:$0xf]
    %v43 = vld [vmem:[#allocation3 + $0x8] sm:$0xf]
    %v44 = vld [vmem:[#allocation3 + $0xc] sm:$0xf]
    %v45 = vld [vmem:[#allocation3 + $0x10] sm:$0xf]
    %v46 = vld [vmem:[#allocation3 + $0x14] sm:$0xf]
    %v47 = vld [vmem:[#allocation3 + $0x18] sm:$0xf]
    %v48 = vld [vmem:[#allocation3 + $0x1c] sm:$0xf]
    %v49 = vld [vmem:[#allocation3 + $0x20] sm:$0xf]
    %v50 = vld [vmem:[#allocation3 + $0x24] sm:$0xf]
    %v51 = vld [vmem:[#allocation3 + $0x28] sm:$0xf]
    %v52 = vld [vmem:[#allocation3 + $0x2c] sm:$0xf]
    %v53 = vld [vmem:[#allocation3 + $0x30] sm:$0xf]
    %v54 = vld [vmem:[#allocation3 + $0x34] sm:$0xf]
    %v55 = vld [vmem:[#allocation3 + $0x38] sm:$0xf]
    %v56 = vld [vmem:[#allocation3 + $0x3c] sm:$0xf]
    %v57 = vld [vmem:[#allocation2] sm:$0x3]
    %vm58 = vcmask 1041408
    %v59 = vsel %vm58, %v40, 0.0
    %60 = vadd.xlane.f32.xlu0 %v59
    %v61 = vpop.xlane.xlu0 %60
    %v62 = vadd.f32 %v57, %v61
    %vm63 = vcmask 1024
    %64 = vst.msk [vmem:[#allocation2] sm:$0x3] %vm63, %v62
    %66 = vset.pattern.permute.xlu0 0
    %67 = vperm.xlu0 %66, %v57
    %v68 = vpop.permute.xlu0 %67
    %v86 = vunpack.c.l.b16 %v41
    %v87 = vunpack.c.l.b16 %v42
    %v88 = vunpack.c.l.b16 %v43
    %v89 = vunpack.c.l.b16 %v44
    %v90 = vunpack.c.l.b16 %v45
    %v91 = vunpack.c.l.b16 %v46
    %v92 = vunpack.c.l.b16 %v47
    %v93 = vunpack.c.l.b16 %v48
    %v94 = vunpack.c.l.b16 %v49
    %v95 = vunpack.c.l.b16 %v50
    %v96 = vunpack.c.l.b16 %v51
    %v97 = vunpack.c.l.b16 %v52
    %v98 = vunpack.c.l.b16 %v53
    %v99 = vunpack.c.l.b16 %v54
    %v100 = vunpack.c.l.b16 %v55
    %v101 = vunpack.c.l.b16 %v56
    %v102 = vpack.c.b16 %v87, %v86
    %v103 = vpack.c.b16 %v89, %v88
    %v104 = vpack.c.b16 %v91, %v90
    %v105 = vpack.c.b16 %v93, %v92
    %v106 = vpack.c.b16 %v95, %v94
    %v107 = vpack.c.b16 %v97, %v96
    %v108 = vpack.c.b16 %v99, %v98
    %v109 = vpack.c.b16 %v101, %v100
    %118 = vmatprep.subr.bf16.mxu0 0
    %119 = vmatpush1.bf16.msra.mxu0 %v102
    %120 = vmatprep.subr.bf16.mxu0 0
    %121 = vmatpush1.bf16.msra.mxu0 %v103
    %122 = vmatprep.subr.bf16.mxu0 0
    %123 = vmatpush1.bf16.msra.mxu0 %v104
    %124 = vmatprep.subr.bf16.mxu0 0
    %125 = vmatpush1.bf16.msra.mxu0 %v105
    %126 = vmatprep.subr.bf16.mxu0 0
    %127 = vmatpush1.bf16.msra.mxu0 %v106
    %128 = vmatprep.subr.bf16.mxu0 0
    %129 = vmatpush1.bf16.msra.mxu0 %v107
    %130 = vmatprep.subr.bf16.mxu0 0
    %131 = vmatpush1.bf16.msra.mxu0 %v108
    %132 = vmatprep.subr.bf16.mxu0 0
    %133 = vmatpush1.bf16.msra.mxu0 %v109
    %134 = vmatprep.subr.bf16.mxu0 0
    %135 = vmatpush1.bf16.msra.mxu0 0
    %136 = vmatprep.subr.bf16.mxu0 0
    %137 = vmatpush1.bf16.msra.mxu0 0
    %138 = vmatprep.subr.bf16.mxu0 0
    %139 = vmatpush1.bf16.msra.mxu0 0
    %140 = vmatprep.subr.bf16.mxu0 0
    %141 = vmatpush1.bf16.msra.mxu0 0
    %142 = vmatprep.subr.bf16.mxu0 0
    %143 = vmatpush1.bf16.msra.mxu0 0
    %144 = vmatprep.subr.bf16.mxu0 0
    %145 = vmatpush1.bf16.msra.mxu0 0
    %146 = vmatprep.subr.bf16.mxu0 0
    %147 = vmatpush1.bf16.msra.mxu0 0
    %148 = vmatprep.subr.bf16.mxu0 0
    %149 = vmatpush1.bf16.msra.mxu0 0
    %150 = vmatprep.mubr.bf16.mxu0 0
    %151 = vmatmul.mubr.bf16.gmra.mrb[0].mxu0 %v39
    %v152 = vpop.f32.mrb[0].mxu0
    %v153 = vadd.f32 %v68, %v152
    %v154 = vpop.f32.mrb[0].mxu0
    %v155 = vpop.f32.mrb[0].mxu0
    %v156 = vpop.f32.mrb[0].mxu0
    %157 = vdwg.mxu0
    %v158 = vmul.f32 %v153, %v40
    %v159 = vadd.f32 %v158, 1.0
    %v160 = vld [vmem:[%s2] sm:$0xff]
    %v161 = vld [vmem:[%s2 + $0x8] sm:$0xff]
    %v164 = vunpack.c.l.s4 1966171168
    %v165 = vunpack.c.0.s8 %v164
    %v166 = vlaneseq
    %v167 = vshrl.u32 %v166, 7
    %v168 = vsub.s32 %v165, %v167
    %v169 = vrot.slane %v159, %v168
    %v170 = vcombine.high %v169, %v169
    %v172 = vunpack.c.l.s4 1966171168
    %v173 = vunpack.c.0.s8 %v172
    %v174 = vlaneseq
    %v175 = vshrl.u32 %v174, 7
    %v176 = vsub.s32 %v173, %v175
    %v177 = vrot.slane %v169, %v176
    %v179 = vunpack.c.l.s4 1966171168
    %v180 = vunpack.c.0.s8 %v179
    %v181 = vlaneseq
    %v182 = vshrl.u32 %v181, 7
    %v183 = vsub.s32 %v180, %v182
    %v184 = vrot.slane %v170, %v183
    %v185 = vlaneseq
    %v186 = vshrl.u32 %v185, 7
    %v187 = vsub.s32 0, %v186
    %v188 = vrot.slane %v177, %v187
    %v189 = vlaneseq
    %v190 = vshrl.u32 %v189, 7
    %v191 = vsub.s32 0, %v190
    %v192 = vrot.slane %v184, %v191
    %196 = vset.pattern.permute.xlu0 0
    %197 = vperm.xlu0 %196, %v160
    %v198 = vpop.permute.xlu0 %197
    %201 = vset.pattern.permute.xlu0 0
    %202 = vperm.xlu0 %201, %v161
    %v203 = vpop.permute.xlu0 %202
    %v205 = vmul.f32 %v188, %v198
    %v206 = vmul.f32 %v188, %v203
    %v207 = vmul.f32 %v192, %v198
    %v208 = vmul.f32 %v192, %v203
    %v211 = vunpack.c.l.s4 1966171168
    %v212 = vunpack.c.0.s8 %v211
    %v213 = vlaneseq
    %v214 = vshrl.u32 %v213, 7
    %v215 = vsub.s32 %v212, %v214
    %v216 = vrot.slane %v40, %v215
    %v217 = vcombine.high %v216, %v216
    %v219 = vunpack.c.l.s4 1966171168
    %v220 = vunpack.c.0.s8 %v219
    %v221 = vlaneseq
    %v222 = vshrl.u32 %v221, 7
    %v223 = vsub.s32 %v220, %v222
    %v224 = vrot.slane %v216, %v223
    %v226 = vunpack.c.l.s4 1966171168
    %v227 = vunpack.c.0.s8 %v226
    %v228 = vlaneseq
    %v229 = vshrl.u32 %v228, 7
    %v230 = vsub.s32 %v227, %v229
    %v231 = vrot.slane %v217, %v230
    %v232 = vand.u32 2147483647, %v205
    %vm233 = vcmp.le.f32.partialorder %v232, 0.7853982
    %vm234 = vcmp.lt.s32.totalorder %v205, 0
    %v235 = vand.u32 %v205, 2139095040
    %v236 = vshrl.u32 %v235, 23
    %v237 = vsub.s32 %v236, 127
    %v238 = vand.u32 2147483647, %v205
    %v239 = vand.u32 %v238, 8388607
    %v240 = vor.u32 %v239, 8388608
    %v241 = vsub.s32 0, %v240
    %v242 = vadd.s32 %v237, 1
    %vm243 = vcmp.gt.s32.totalorder %v242, 0
    %v244 = vsel %vm243, %v242, 0
    %v245 = vshrl.u32 %v244, 5
    %v246 = vand.u32 %v244, 31
    %v247 = vsub.s32 32, %v246
    %v248 = vshrl.u32 683565275, %v247
    %v249 = vshll.u32 683565275, %v246
    %v250 = vshrl.u32 2475754826, %v247
    %v251 = vor.u32 %v249, %v250
    %v252 = vshll.u32 2475754826, %v246
    %v253 = vshrl.u32 2131351028, %v247
    %v254 = vor.u32 %v252, %v253
    %v255 = vshll.u32 2131351028, %v246
    %v256 = vshrl.u32 2102212464, %v247
    %v257 = vor.u32 %v255, %v256
    %v258 = vshll.u32 2102212464, %v246
    %v259 = vshrl.u32 920167782, %v247
    %v260 = vor.u32 %v258, %v259
    %v261 = vshll.u32 920167782, %v246
    %v262 = vshrl.u32 1326507024, %v247
    %v263 = vor.u32 %v261, %v262
    %vm264 = vcmp.lt.s32.totalorder %v245, 1
    %vm265 = vcmp.lt.s32.totalorder %v245, 2
    %vm266 = vcmp.lt.s32.totalorder %v245, 3
    %vm267 = vcmp.lt.s32.totalorder %v245, 4
    %v268 = vsel %vm264, %v248, %v251
    %v269 = vsel %vm267, %v257, 2102212464
    %v270 = vsel %vm266, %v254, %v269
    %v271 = vsel %vm265, %v268, %v270
    %v272 = vsel %vm264, %v251, %v254
    %v273 = vsel %vm267, %v260, 920167782
    %v274 = vsel %vm266, %v257, %v273
    %v275 = vsel %vm265, %v272, %v274
    %v276 = vsel %vm264, %v254, %v257
    %v277 = vsel %vm267, %v263, 1326507024
    %v278 = vsel %vm266, %v260, %v277
    %v279 = vsel %vm265, %v276, %v278
    %v280 = vshll.u32 %v240, 8
    %v281 = vmul.u32.u64.compose %v280, %v279
    %v282 = vextract.low.u32 %v281
    %v283 = vextract.high.u32 %v281
    %v284 = vmul.u32.u64.compose %v280, %v275
    %v285 = vextract.low.u32 %v284
    %v286 = vextract.high.u32 %v284
    %v287 = vmul.u32 %v280, %v271
    %v288 = vadd.s32 %v283, %v285
    %vm289 = vc.u32 %v283, %v285
    %v290 = vadd.s32 %v286, 1
    %v291 = vsel %vm289, %v290, %v286
    %v292 = vadd.s32 %v287, %v291
    %v293 = vadd.s32 %v292, 536870912
    %v294 = vshrl.u32 %v293, 30
    %v295 = vshll.u32 %v294, 30
    %v296 = vsub.s32 %v292, %v295
    %vm297 = vcmp.lt.s32.totalorder %v296, 0
    %v298 = vsub.s32 0, %v296
    %v299 = vsel %vm297, %v298, %v296
    %v300 = vclz %v299
    %v301 = vsub.s32 %v300, 2
    %vm302 = vcmp.gt.s32.totalorder 0, %v301
    %v303 = vsel %vm302, 0, %v301
    %v304 = vsub.s32 32, %v303
    %v305 = vshll.u32 %v296, %v303
    %v306 = vshrl.u32 %v288, %v304
    %v307 = vor.u32 %v305, %v306
    %v308 = vsub.s32 4294967266, %v303
    %v309 = vadd.s32 %v308, 127
    %v310 = vshll.u32 %v309, 23
    %v311 = vor.u32 4788187, %v310
    %v312 = vand.u32 2147483647, %v311
    %v314 = vcvt.s32.f32 %v307
    %v315 = vmul.f32 %v314, %v312
    %v316 = vxor.u32 %v315, 2147483648
    %v317 = vsel %vm234, %v316, %v315
    %v318 = vsub.s32 4, %v294
    %v319 = vsel %vm234, %v318, %v294
    %v320 = vsel %vm233, %v205, %v317
    %v321 = vsel %vm233, 0, %v319
    %v322 = vcosq.f32.pop %v320
    %v323 = vsinq.f32.pop %v320
    %vm324 = vweird.f32 %v205
    %v325 = vadd.s32 %v321, 3
    %v326 = vand.u32 %v325, 3
    %vm327 = vcmp.lt.s32.totalorder %v326, 2
    %vm328 = vcmp.eq.s32.totalorder %v326, 0
    %v329 = vxor.u32 %v323, 2147483648
    %v330 = vsel %vm328, %v322, %v329
    %vm331 = vcmp.eq.s32.totalorder %v326, 2
    %v332 = vxor.u32 %v322, 2147483648
    %v333 = vsel %vm331, %v332, %v323
    %v334 = vsel %vm327, %v330, %v333
    %v335 = vsel %vm324, nan, %v334
    %v336 = vand.u32 2147483647, %v206
    %vm337 = vcmp.le.f32.partialorder %v336, 0.7853982
    %vm338 = vcmp.lt.s32.totalorder %v206, 0
    %v339 = vand.u32 %v206, 2139095040
    %v340 = vshrl.u32 %v339, 23
    %v341 = vsub.s32 %v340, 127
    %v342 = vand.u32 2147483647, %v206
    %v343 = vand.u32 %v342, 8388607
    %v344 = vor.u32 %v343, 8388608
    %v345 = vsub.s32 0, %v344
    %v346 = vadd.s32 %v341, 1
    %vm347 = vcmp.gt.s32.totalorder %v346, 0
    %v348 = vsel %vm347, %v346, 0
    %v349 = vshrl.u32 %v348, 5
    %v350 = vand.u32 %v348, 31
    %v351 = vsub.s32 32, %v350
    %v352 = vshrl.u32 683565275, %v351
    %v353 = vshll.u32 683565275, %v350
    %v354 = vshrl.u32 2475754826, %v351
    %v355 = vor.u32 %v353, %v354
    %v356 = vshll.u32 2475754826, %v350
    %v357 = vshrl.u32 2131351028, %v351
    %v358 = vor.u32 %v356, %v357
    %v359 = vshll.u32 2131351028, %v350
    %v360 = vshrl.u32 2102212464, %v351
    %v361 = vor.u32 %v359, %v360
    %v362 = vshll.u32 2102212464, %v350
    %v363 = vshrl.u32 920167782, %v351
    %v364 = vor.u32 %v362, %v363
    %v365 = vshll.u32 920167782, %v350
    %v366 = vshrl.u32 1326507024, %v351
    %v367 = vor.u32 %v365, %v366
    %vm368 = vcmp.lt.s32.totalorder %v349, 1
    %vm369 = vcmp.lt.s32.totalorder %v349, 2
    %vm370 = vcmp.lt.s32.totalorder %v349, 3
    %vm371 = vcmp.lt.s32.totalorder %v349, 4
    %v372 = vsel %vm368, %v352, %v355
    %v373 = vsel %vm371, %v361, 2102212464
    %v374 = vsel %vm370, %v358, %v373
    %v375 = vsel %vm369, %v372, %v374
    %v376 = vsel %vm368, %v355, %v358
    %v377 = vsel %vm371, %v364, 920167782
    %v378 = vsel %vm370, %v361, %v377
    %v379 = vsel %vm369, %v376, %v378
    %v380 = vsel %vm368, %v358, %v361
    %v381 = vsel %vm371, %v367, 1326507024
    %v382 = vsel %vm370, %v364, %v381
    %v383 = vsel %vm369, %v380, %v382
    %v384 = vshll.u32 %v344, 8
    %v385 = vmul.u32.u64.compose %v384, %v383
    %v386 = vextract.low.u32 %v385
    %v387 = vextract.high.u32 %v385
    %v388 = vmul.u32.u64.compose %v384, %v379
    %v389 = vextract.low.u32 %v388
    %v390 = vextract.high.u32 %v388
    %v391 = vmul.u32 %v384, %v375
    %v392 = vadd.s32 %v387, %v389
    %vm393 = vc.u32 %v387, %v389
    %v394 = vadd.s32 %v390, 1
    %v395 = vsel %vm393, %v394, %v390
    %v396 = vadd.s32 %v391, %v395
    %v397 = vadd.s32 %v396, 536870912
    %v398 = vshrl.u32 %v397, 30
    %v399 = vshll.u32 %v398, 30
    %v400 = vsub.s32 %v396, %v399
    %vm401 = vcmp.lt.s32.totalorder %v400, 0
    %v402 = vsub.s32 0, %v400
    %v403 = vsel %vm401, %v402, %v400
    %v404 = vclz %v403
    %v405 = vsub.s32 %v404, 2
    %vm406 = vcmp.gt.s32.totalorder 0, %v405
    %v407 = vsel %vm406, 0, %v405
    %v408 = vsub.s32 32, %v407
    %v409 = vshll.u32 %v400, %v407
    %v410 = vshrl.u32 %v392, %v408
    %v411 = vor.u32 %v409, %v410
    %v412 = vsub.s32 4294967266, %v407
    %v413 = vadd.s32 %v412, 127
    %v414 = vshll.u32 %v413, 23
    %v415 = vor.u32 4788187, %v414
    %v416 = vand.u32 2147483647, %v415
    %v418 = vcvt.s32.f32 %v411
    %v419 = vmul.f32 %v418, %v416
    %v420 = vxor.u32 %v419, 2147483648
    %v421 = vsel %vm338, %v420, %v419
    %v422 = vsub.s32 4, %v398
    %v423 = vsel %vm338, %v422, %v398
    %v424 = vsel %vm337, %v206, %v421
    %v425 = vsel %vm337, 0, %v423
    %v426 = vcosq.f32.pop %v424
    %v427 = vsinq.f32.pop %v424
    %vm428 = vweird.f32 %v206
    %v429 = vadd.s32 %v425, 3
    %v430 = vand.u32 %v429, 3
    %vm431 = vcmp.lt.s32.totalorder %v430, 2
    %vm432 = vcmp.eq.s32.totalorder %v430, 0
    %v433 = vxor.u32 %v427, 2147483648
    %v434 = vsel %vm432, %v426, %v433
    %vm435 = vcmp.eq.s32.totalorder %v430, 2
    %v436 = vxor.u32 %v426, 2147483648
    %v437 = vsel %vm435, %v436, %v427
    %v438 = vsel %vm431, %v434, %v437
    %v439 = vsel %vm428, nan, %v438
    %v440 = vand.u32 2147483647, %v207
    %vm441 = vcmp.le.f32.partialorder %v440, 0.7853982
    %vm442 = vcmp.lt.s32.totalorder %v207, 0
    %v443 = vand.u32 %v207, 2139095040
    %v444 = vshrl.u32 %v443, 23
    %v445 = vsub.s32 %v444, 127
    %v446 = vand.u32 2147483647, %v207
    %v447 = vand.u32 %v446, 8388607
    %v448 = vor.u32 %v447, 8388608
    %v449 = vsub.s32 0, %v448
    %v450 = vadd.s32 %v445, 1
    %vm451 = vcmp.gt.s32.totalorder %v450, 0
    %v452 = vsel %vm451, %v450, 0
    %v453 = vshrl.u32 %v452, 5
    %v454 = vand.u32 %v452, 31
    %v455 = vsub.s32 32, %v454
    %v456 = vshrl.u32 683565275, %v455
    %v457 = vshll.u32 683565275, %v454
    %v458 = vshrl.u32 2475754826, %v455
    %v459 = vor.u32 %v457, %v458
    %v460 = vshll.u32 2475754826, %v454
    %v461 = vshrl.u32 2131351028, %v455
    %v462 = vor.u32 %v460, %v461
    %v463 = vshll.u32 2131351028, %v454
    %v464 = vshrl.u32 2102212464, %v455
    %v465 = vor.u32 %v463, %v464
    %v466 = vshll.u32 2102212464, %v454
    %v467 = vshrl.u32 920167782, %v455
    %v468 = vor.u32 %v466, %v467
    %v469 = vshll.u32 920167782, %v454
    %v470 = vshrl.u32 1326507024, %v455
    %v471 = vor.u32 %v469, %v470
    %vm472 = vcmp.lt.s32.totalorder %v453, 1
    %vm473 = vcmp.lt.s32.totalorder %v453, 2
    %vm474 = vcmp.lt.s32.totalorder %v453, 3
    %vm475 = vcmp.lt.s32.totalorder %v453, 4
    %v476 = vsel %vm472, %v456, %v459
    %v477 = vsel %vm475, %v465, 2102212464
    %v478 = vsel %vm474, %v462, %v477
    %v479 = vsel %vm473, %v476, %v478
    %v480 = vsel %vm472, %v459, %v462
    %v481 = vsel %vm475, %v468, 920167782
    %v482 = vsel %vm474, %v465, %v481
    %v483 = vsel %vm473, %v480, %v482
    %v484 = vsel %vm472, %v462, %v465
    %v485 = vsel %vm475, %v471, 1326507024
    %v486 = vsel %vm474, %v468, %v485
    %v487 = vsel %vm473, %v484, %v486
    %v488 = vshll.u32 %v448, 8
    %v489 = vmul.u32.u64.compose %v488, %v487
    %v490 = vextract.low.u32 %v489
    %v491 = vextract.high.u32 %v489
    %v492 = vmul.u32.u64.compose %v488, %v483
    %v493 = vextract.low.u32 %v492
    %v494 = vextract.high.u32 %v492
    %v495 = vmul.u32 %v488, %v479
    %v496 = vadd.s32 %v491, %v493
    %vm497 = vc.u32 %v491, %v493
    %v498 = vadd.s32 %v494, 1
    %v499 = vsel %vm497, %v498, %v494
    %v500 = vadd.s32 %v495, %v499
    %v501 = vadd.s32 %v500, 536870912
    %v502 = vshrl.u32 %v501, 30
    %v503 = vshll.u32 %v502, 30
    %v504 = vsub.s32 %v500, %v503
    %vm505 = vcmp.lt.s32.totalorder %v504, 0
    %v506 = vsub.s32 0, %v504
    %v507 = vsel %vm505, %v506, %v504
    %v508 = vclz %v507
    %v509 = vsub.s32 %v508, 2
    %vm510 = vcmp.gt.s32.totalorder 0, %v509
    %v511 = vsel %vm510, 0, %v509
    %v512 = vsub.s32 32, %v511
    %v513 = vshll.u32 %v504, %v511
    %v514 = vshrl.u32 %v496, %v512
    %v515 = vor.u32 %v513, %v514
    %v516 = vsub.s32 4294967266, %v511
    %v517 = vadd.s32 %v516, 127
    %v518 = vshll.u32 %v517, 23
    %v519 = vor.u32 4788187, %v518
    %v520 = vand.u32 2147483647, %v519
    %v522 = vcvt.s32.f32 %v515
    %v523 = vmul.f32 %v522, %v520
    %v524 = vxor.u32 %v523, 2147483648
    %v525 = vsel %vm442, %v524, %v523
    %v526 = vsub.s32 4, %v502
    %v527 = vsel %vm442, %v526, %v502
    %v528 = vsel %vm441, %v207, %v525
    %v529 = vsel %vm441, 0, %v527
    %v530 = vcosq.f32.pop %v528
    %v531 = vsinq.f32.pop %v528
    %vm532 = vweird.f32 %v207
    %v533 = vadd.s32 %v529, 3
    %v534 = vand.u32 %v533, 3
    %vm535 = vcmp.lt.s32.totalorder %v534, 2
    %vm536 = vcmp.eq.s32.totalorder %v534, 0
    %v537 = vxor.u32 %v531, 2147483648
    %v538 = vsel %vm536, %v530, %v537
    %vm539 = vcmp.eq.s32.totalorder %v534, 2
    %v540 = vxor.u32 %v530, 2147483648
    %v541 = vsel %vm539, %v540, %v531
    %v542 = vsel %vm535, %v538, %v541
    %v543 = vsel %vm532, nan, %v542
    %v544 = vand.u32 2147483647, %v208
    %vm545 = vcmp.le.f32.partialorder %v544, 0.7853982
    %vm546 = vcmp.lt.s32.totalorder %v208, 0
    %v547 = vand.u32 %v208, 2139095040
    %v548 = vshrl.u32 %v547, 23
    %v549 = vsub.s32 %v548, 127
    %v550 = vand.u32 2147483647, %v208
    %v551 = vand.u32 %v550, 8388607
    %v552 = vor.u32 %v551, 8388608
    %v553 = vsub.s32 0, %v552
    %v554 = vadd.s32 %v549, 1
    %vm555 = vcmp.gt.s32.totalorder %v554, 0
    %v556 = vsel %vm555, %v554, 0
    %v557 = vshrl.u32 %v556, 5
    %v558 = vand.u32 %v556, 31
    %v559 = vsub.s32 32, %v558
    %v560 = vshrl.u32 683565275, %v559
    %v561 = vshll.u32 683565275, %v558
    %v562 = vshrl.u32 2475754826, %v559
    %v563 = vor.u32 %v561, %v562
    %v564 = vshll.u32 2475754826, %v558
    %v565 = vshrl.u32 2131351028, %v559
    %v566 = vor.u32 %v564, %v565
    %v567 = vshll.u32 2131351028, %v558
    %v568 = vshrl.u32 2102212464, %v559
    %v569 = vor.u32 %v567, %v568
    %v570 = vshll.u32 2102212464, %v558
    %v571 = vshrl.u32 920167782, %v559
    %v572 = vor.u32 %v570, %v571
    %v573 = vshll.u32 920167782, %v558
    %v574 = vshrl.u32 1326507024, %v559
    %v575 = vor.u32 %v573, %v574
    %vm576 = vcmp.lt.s32.totalorder %v557, 1
    %vm577 = vcmp.lt.s32.totalorder %v557, 2
    %vm578 = vcmp.lt.s32.totalorder %v557, 3
    %vm579 = vcmp.lt.s32.totalorder %v557, 4
    %v580 = vsel %vm576, %v560, %v563
    %v581 = vsel %vm579, %v569, 2102212464
    %v582 = vsel %vm578, %v566, %v581
    %v583 = vsel %vm577, %v580, %v582
    %v584 = vsel %vm576, %v563, %v566
    %v585 = vsel %vm579, %v572, 920167782
    %v586 = vsel %vm578, %v569, %v585
    %v587 = vsel %vm577, %v584, %v586
    %v588 = vsel %vm576, %v566, %v569
    %v589 = vsel %vm579, %v575, 1326507024
    %v590 = vsel %vm578, %v572, %v589
    %v591 = vsel %vm577, %v588, %v590
    %v592 = vshll.u32 %v552, 8
    %v593 = vmul.u32.u64.compose %v592, %v591
    %v594 = vextract.low.u32 %v593
    %v595 = vextract.high.u32 %v593
    %v596 = vmul.u32.u64.compose %v592, %v587
    %v597 = vextract.low.u32 %v596
    %v598 = vextract.high.u32 %v596
    %v599 = vmul.u32 %v592, %v583
    %v600 = vadd.s32 %v595, %v597
    %vm601 = vc.u32 %v595, %v597
    %v602 = vadd.s32 %v598, 1
    %v603 = vsel %vm601, %v602, %v598
    %v604 = vadd.s32 %v599, %v603
    %v605 = vadd.s32 %v604, 536870912
    %v606 = vshrl.u32 %v605, 30
    %v607 = vshll.u32 %v606, 30
    %v608 = vsub.s32 %v604, %v607
    %vm609 = vcmp.lt.s32.totalorder %v608, 0
    %v610 = vsub.s32 0, %v608
    %v611 = vsel %vm609, %v610, %v608
    %v612 = vclz %v611
    %v613 = vsub.s32 %v612, 2
    %vm614 = vcmp.gt.s32.totalorder 0, %v613
    %v615 = vsel %vm614, 0, %v613
    %v616 = vsub.s32 32, %v615
    %v617 = vshll.u32 %v608, %v615
    %v618 = vshrl.u32 %v600, %v616
    %v619 = vor.u32 %v617, %v618
    %v620 = vsub.s32 4294967266, %v615
    %v621 = vadd.s32 %v620, 127
    %v622 = vshll.u32 %v621, 23
    %v623 = vor.u32 4788187, %v622
    %v624 = vand.u32 2147483647, %v623
    %v626 = vcvt.s32.f32 %v619
    %v627 = vmul.f32 %v626, %v624
    %v628 = vxor.u32 %v627, 2147483648
    %v629 = vsel %vm546, %v628, %v627
    %v630 = vsub.s32 4, %v606
    %v631 = vsel %vm546, %v630, %v606
    %v632 = vsel %vm545, %v208, %v629
    %v633 = vsel %vm545, 0, %v631
    %v634 = vcosq.f32.pop %v632
    %v635 = vsinq.f32.pop %v632
    %vm636 = vweird.f32 %v208
    %v637 = vadd.s32 %v633, 3
    %v638 = vand.u32 %v637, 3
    %vm639 = vcmp.lt.s32.totalorder %v638, 2
    %vm640 = vcmp.eq.s32.totalorder %v638, 0
    %v641 = vxor.u32 %v635, 2147483648
    %v642 = vsel %vm640, %v634, %v641
    %vm643 = vcmp.eq.s32.totalorder %v638, 2
    %v644 = vxor.u32 %v634, 2147483648
    %v645 = vsel %vm643, %v644, %v635
    %v646 = vsel %vm639, %v642, %v645
    %v647 = vsel %vm636, nan, %v646
    %v648 = vlaneseq
    %v649 = vshrl.u32 %v648, 7
    %v650 = vsub.s32 0, %v649
    %v651 = vrot.slane %v224, %v650
    %v652 = vlaneseq
    %v653 = vshrl.u32 %v652, 7
    %v654 = vsub.s32 0, %v653
    %v655 = vrot.slane %v231, %v654
    %v658 = vmul.f32 %v335, %v651
    %v659 = vmul.f32 %v439, %v651
    %v660 = vmul.f32 %v543, %v655
    %v661 = vmul.f32 %v647, %v655
    %v662 = vand.u32 2147483647, %v205
    %vm663 = vcmp.le.f32.partialorder %v662, 0.7853982
    %vm664 = vcmp.lt.s32.totalorder %v205, 0
    %v665 = vand.u32 %v205, 2139095040
    %v666 = vshrl.u32 %v665, 23
    %v667 = vsub.s32 %v666, 127
    %v668 = vand.u32 2147483647, %v205
    %v669 = vand.u32 %v668, 8388607
    %v670 = vor.u32 %v669, 8388608
    %v671 = vsub.s32 0, %v670
    %v672 = vadd.s32 %v667, 1
    %vm673 = vcmp.gt.s32.totalorder %v672, 0
    %v674 = vsel %vm673, %v672, 0
    %v675 = vshrl.u32 %v674, 5
    %v676 = vand.u32 %v674, 31
    %v677 = vsub.s32 32, %v676
    %v678 = vshrl.u32 683565275, %v677
    %v679 = vshll.u32 683565275, %v676
    %v680 = vshrl.u32 2475754826, %v677
    %v681 = vor.u32 %v679, %v680
    %v682 = vshll.u32 2475754826, %v676
    %v683 = vshrl.u32 2131351028, %v677
    %v684 = vor.u32 %v682, %v683
    %v685 = vshll.u32 2131351028, %v676
    %v686 = vshrl.u32 2102212464, %v677
    %v687 = vor.u32 %v685, %v686
    %v688 = vshll.u32 2102212464, %v676
    %v689 = vshrl.u32 920167782, %v677
    %v690 = vor.u32 %v688, %v689
    %v691 = vshll.u32 920167782, %v676
    %v692 = vshrl.u32 1326507024, %v677
    %v693 = vor.u32 %v691, %v692
    %vm694 = vcmp.lt.s32.totalorder %v675, 1
    %vm695 = vcmp.lt.s32.totalorder %v675, 2
    %vm696 = vcmp.lt.s32.totalorder %v675, 3
    %vm697 = vcmp.lt.s32.totalorder %v675, 4
    %v698 = vsel %vm694, %v678, %v681
    %v699 = vsel %vm697, %v687, 2102212464
    %v700 = vsel %vm696, %v684, %v699
    %v701 = vsel %vm695, %v698, %v700
    %v702 = vsel %vm694, %v681, %v684
    %v703 = vsel %vm697, %v690, 920167782
    %v704 = vsel %vm696, %v687, %v703
    %v705 = vsel %vm695, %v702, %v704
    %v706 = vsel %vm694, %v684, %v687
    %v707 = vsel %vm697, %v693, 1326507024
    %v708 = vsel %vm696, %v690, %v707
    %v709 = vsel %vm695, %v706, %v708
    %v710 = vshll.u32 %v670, 8
    %v711 = vmul.u32.u64.compose %v710, %v709
    %v712 = vextract.low.u32 %v711
    %v713 = vextract.high.u32 %v711
    %v714 = vmul.u32.u64.compose %v710, %v705
    %v715 = vextract.low.u32 %v714
    %v716 = vextract.high.u32 %v714
    %v717 = vmul.u32 %v710, %v701
    %v718 = vadd.s32 %v713, %v715
    %vm719 = vc.u32 %v713, %v715
    %v720 = vadd.s32 %v716, 1
    %v721 = vsel %vm719, %v720, %v716
    %v722 = vadd.s32 %v717, %v721
    %v723 = vadd.s32 %v722, 536870912
    %v724 = vshrl.u32 %v723, 30
    %v725 = vshll.u32 %v724, 30
    %v726 = vsub.s32 %v722, %v725
    %vm727 = vcmp.lt.s32.totalorder %v726, 0
    %v728 = vsub.s32 0, %v726
    %v729 = vsel %vm727, %v728, %v726
    %v730 = vclz %v729
    %v731 = vsub.s32 %v730, 2
    %vm732 = vcmp.gt.s32.totalorder 0, %v731
    %v733 = vsel %vm732, 0, %v731
    %v734 = vsub.s32 32, %v733
    %v735 = vshll.u32 %v726, %v733
    %v736 = vshrl.u32 %v718, %v734
    %v737 = vor.u32 %v735, %v736
    %v738 = vsub.s32 4294967266, %v733
    %v739 = vadd.s32 %v738, 127
    %v740 = vshll.u32 %v739, 23
    %v741 = vor.u32 4788187, %v740
    %v742 = vand.u32 2147483647, %v741
    %v744 = vcvt.s32.f32 %v737
    %v745 = vmul.f32 %v744, %v742
    %v746 = vxor.u32 %v745, 2147483648
    %v747 = vsel %vm664, %v746, %v745
    %v748 = vsub.s32 4, %v724
    %v749 = vsel %vm664, %v748, %v724
    %v750 = vsel %vm663, %v205, %v747
    %v751 = vsel %vm663, 0, %v749
    %v752 = vcosq.f32.pop %v750
    %v753 = vsinq.f32.pop %v750
    %vm754 = vweird.f32 %v205
    %v755 = vand.u32 %v751, 3
    %vm756 = vcmp.lt.s32.totalorder %v755, 2
    %vm757 = vcmp.eq.s32.totalorder %v755, 0
    %v758 = vxor.u32 %v753, 2147483648
    %v759 = vsel %vm757, %v752, %v758
    %vm760 = vcmp.eq.s32.totalorder %v755, 2
    %v761 = vxor.u32 %v752, 2147483648
    %v762 = vsel %vm760, %v761, %v753
    %v763 = vsel %vm756, %v759, %v762
    %v764 = vsel %vm754, nan, %v763
    %v765 = vand.u32 2147483647, %v206
    %vm766 = vcmp.le.f32.partialorder %v765, 0.7853982
    %vm767 = vcmp.lt.s32.totalorder %v206, 0
    %v768 = vand.u32 %v206, 2139095040
    %v769 = vshrl.u32 %v768, 23
    %v770 = vsub.s32 %v769, 127
    %v771 = vand.u32 2147483647, %v206
    %v772 = vand.u32 %v771, 8388607
    %v773 = vor.u32 %v772, 8388608
    %v774 = vsub.s32 0, %v773
    %v775 = vadd.s32 %v770, 1
    %vm776 = vcmp.gt.s32.totalorder %v775, 0
    %v777 = vsel %vm776, %v775, 0
    %v778 = vshrl.u32 %v777, 5
    %v779 = vand.u32 %v777, 31
    %v780 = vsub.s32 32, %v779
    %v781 = vshrl.u32 683565275, %v780
    %v782 = vshll.u32 683565275, %v779
    %v783 = vshrl.u32 2475754826, %v780
    %v784 = vor.u32 %v782, %v783
    %v785 = vshll.u32 2475754826, %v779
    %v786 = vshrl.u32 2131351028, %v780
    %v787 = vor.u32 %v785, %v786
    %v788 = vshll.u32 2131351028, %v779
    %v789 = vshrl.u32 2102212464, %v780
    %v790 = vor.u32 %v788, %v789
    %v791 = vshll.u32 2102212464, %v779
    %v792 = vshrl.u32 920167782, %v780
    %v793 = vor.u32 %v791, %v792
    %v794 = vshll.u32 920167782, %v779
    %v795 = vshrl.u32 1326507024, %v780
    %v796 = vor.u32 %v794, %v795
    %vm797 = vcmp.lt.s32.totalorder %v778, 1
    %vm798 = vcmp.lt.s32.totalorder %v778, 2
    %vm799 = vcmp.lt.s32.totalorder %v778, 3
    %vm800 = vcmp.lt.s32.totalorder %v778, 4
    %v801 = vsel %vm797, %v781, %v784
    %v802 = vsel %vm800, %v790, 2102212464
    %v803 = vsel %vm799, %v787, %v802
    %v804 = vsel %vm798, %v801, %v803
    %v805 = vsel %vm797, %v784, %v787
    %v806 = vsel %vm800, %v793, 920167782
    %v807 = vsel %vm799, %v790, %v806
    %v808 = vsel %vm798, %v805, %v807
    %v809 = vsel %vm797, %v787, %v790
    %v810 = vsel %vm800, %v796, 1326507024
    %v811 = vsel %vm799, %v793, %v810
    %v812 = vsel %vm798, %v809, %v811
    %v813 = vshll.u32 %v773, 8
    %v814 = vmul.u32.u64.compose %v813, %v812
    %v815 = vextract.low.u32 %v814
    %v816 = vextract.high.u32 %v814
    %v817 = vmul.u32.u64.compose %v813, %v808
    %v818 = vextract.low.u32 %v817
    %v819 = vextract.high.u32 %v817
    %v820 = vmul.u32 %v813, %v804
    %v821 = vadd.s32 %v816, %v818
    %vm822 = vc.u32 %v816, %v818
    %v823 = vadd.s32 %v819, 1
    %v824 = vsel %vm822, %v823, %v819
    %v825 = vadd.s32 %v820, %v824
    %v826 = vadd.s32 %v825, 536870912
    %v827 = vshrl.u32 %v826, 30
    %v828 = vshll.u32 %v827, 30
    %v829 = vsub.s32 %v825, %v828
    %vm830 = vcmp.lt.s32.totalorder %v829, 0
    %v831 = vsub.s32 0, %v829
    %v832 = vsel %vm830, %v831, %v829
    %v833 = vclz %v832
    %v834 = vsub.s32 %v833, 2
    %vm835 = vcmp.gt.s32.totalorder 0, %v834
    %v836 = vsel %vm835, 0, %v834
    %v837 = vsub.s32 32, %v836
    %v838 = vshll.u32 %v829, %v836
    %v839 = vshrl.u32 %v821, %v837
    %v840 = vor.u32 %v838, %v839
    %v841 = vsub.s32 4294967266, %v836
    %v842 = vadd.s32 %v841, 127
    %v843 = vshll.u32 %v842, 23
    %v844 = vor.u32 4788187, %v843
    %v845 = vand.u32 2147483647, %v844
    %v847 = vcvt.s32.f32 %v840
    %v848 = vmul.f32 %v847, %v845
    %v849 = vxor.u32 %v848, 2147483648
    %v850 = vsel %vm767, %v849, %v848
    %v851 = vsub.s32 4, %v827
    %v852 = vsel %vm767, %v851, %v827
    %v853 = vsel %vm766, %v206, %v850
    %v854 = vsel %vm766, 0, %v852
    %v855 = vcosq.f32.pop %v853
    %v856 = vsinq.f32.pop %v853
    %vm857 = vweird.f32 %v206
    %v858 = vand.u32 %v854, 3
    %vm859 = vcmp.lt.s32.totalorder %v858, 2
    %vm860 = vcmp.eq.s32.totalorder %v858, 0
    %v861 = vxor.u32 %v856, 2147483648
    %v862 = vsel %vm860, %v855, %v861
    %vm863 = vcmp.eq.s32.totalorder %v858, 2
    %v864 = vxor.u32 %v855, 2147483648
    %v865 = vsel %vm863, %v864, %v856
    %v866 = vsel %vm859, %v862, %v865
    %v867 = vsel %vm857, nan, %v866
    %v868 = vand.u32 2147483647, %v207
    %vm869 = vcmp.le.f32.partialorder %v868, 0.7853982
    %vm870 = vcmp.lt.s32.totalorder %v207, 0
    %v871 = vand.u32 %v207, 2139095040
    %v872 = vshrl.u32 %v871, 23
    %v873 = vsub.s32 %v872, 127
    %v874 = vand.u32 2147483647, %v207
    %v875 = vand.u32 %v874, 8388607
    %v876 = vor.u32 %v875, 8388608
    %v877 = vsub.s32 0, %v876
    %v878 = vadd.s32 %v873, 1
    %vm879 = vcmp.gt.s32.totalorder %v878, 0
    %v880 = vsel %vm879, %v878, 0
    %v881 = vshrl.u32 %v880, 5
    %v882 = vand.u32 %v880, 31
    %v883 = vsub.s32 32, %v882
    %v884 = vshrl.u32 683565275, %v883
    %v885 = vshll.u32 683565275, %v882
    %v886 = vshrl.u32 2475754826, %v883
    %v887 = vor.u32 %v885, %v886
    %v888 = vshll.u32 2475754826, %v882
    %v889 = vshrl.u32 2131351028, %v883
    %v890 = vor.u32 %v888, %v889
    %v891 = vshll.u32 2131351028, %v882
    %v892 = vshrl.u32 2102212464, %v883
    %v893 = vor.u32 %v891, %v892
    %v894 = vshll.u32 2102212464, %v882
    %v895 = vshrl.u32 920167782, %v883
    %v896 = vor.u32 %v894, %v895
    %v897 = vshll.u32 920167782, %v882
    %v898 = vshrl.u32 1326507024, %v883
    %v899 = vor.u32 %v897, %v898
    %vm900 = vcmp.lt.s32.totalorder %v881, 1
    %vm901 = vcmp.lt.s32.totalorder %v881, 2
    %vm902 = vcmp.lt.s32.totalorder %v881, 3
    %vm903 = vcmp.lt.s32.totalorder %v881, 4
    %v904 = vsel %vm900, %v884, %v887
    %v905 = vsel %vm903, %v893, 2102212464
    %v906 = vsel %vm902, %v890, %v905
    %v907 = vsel %vm901, %v904, %v906
    %v908 = vsel %vm900, %v887, %v890
    %v909 = vsel %vm903, %v896, 920167782
    %v910 = vsel %vm902, %v893, %v909
    %v911 = vsel %vm901, %v908, %v910
    %v912 = vsel %vm900, %v890, %v893
    %v913 = vsel %vm903, %v899, 1326507024
    %v914 = vsel %vm902, %v896, %v913
    %v915 = vsel %vm901, %v912, %v914
    %v916 = vshll.u32 %v876, 8
    %v917 = vmul.u32.u64.compose %v916, %v915
    %v918 = vextract.low.u32 %v917
    %v919 = vextract.high.u32 %v917
    %v920 = vmul.u32.u64.compose %v916, %v911
    %v921 = vextract.low.u32 %v920
    %v922 = vextract.high.u32 %v920
    %v923 = vmul.u32 %v916, %v907
    %v924 = vadd.s32 %v919, %v921
    %vm925 = vc.u32 %v919, %v921
    %v926 = vadd.s32 %v922, 1
    %v927 = vsel %vm925, %v926, %v922
    %v928 = vadd.s32 %v923, %v927
    %v929 = vadd.s32 %v928, 536870912
    %v930 = vshrl.u32 %v929, 30
    %v931 = vshll.u32 %v930, 30
    %v932 = vsub.s32 %v928, %v931
    %vm933 = vcmp.lt.s32.totalorder %v932, 0
    %v934 = vsub.s32 0, %v932
    %v935 = vsel %vm933, %v934, %v932
    %v936 = vclz %v935
    %v937 = vsub.s32 %v936, 2
    %vm938 = vcmp.gt.s32.totalorder 0, %v937
    %v939 = vsel %vm938, 0, %v937
    %v940 = vsub.s32 32, %v939
    %v941 = vshll.u32 %v932, %v939
    %v942 = vshrl.u32 %v924, %v940
    %v943 = vor.u32 %v941, %v942
    %v944 = vsub.s32 4294967266, %v939
    %v945 = vadd.s32 %v944, 127
    %v946 = vshll.u32 %v945, 23
    %v947 = vor.u32 4788187, %v946
    %v948 = vand.u32 2147483647, %v947
    %v950 = vcvt.s32.f32 %v943
    %v951 = vmul.f32 %v950, %v948
    %v952 = vxor.u32 %v951, 2147483648
    %v953 = vsel %vm870, %v952, %v951
    %v954 = vsub.s32 4, %v930
    %v955 = vsel %vm870, %v954, %v930
    %v956 = vsel %vm869, %v207, %v953
    %v957 = vsel %vm869, 0, %v955
    %v958 = vcosq.f32.pop %v956
    %v959 = vsinq.f32.pop %v956
    %vm960 = vweird.f32 %v207
    %v961 = vand.u32 %v957, 3
    %vm962 = vcmp.lt.s32.totalorder %v961, 2
    %vm963 = vcmp.eq.s32.totalorder %v961, 0
    %v964 = vxor.u32 %v959, 2147483648
    %v965 = vsel %vm963, %v958, %v964
    %vm966 = vcmp.eq.s32.totalorder %v961, 2
    %v967 = vxor.u32 %v958, 2147483648
    %v968 = vsel %vm966, %v967, %v959
    %v969 = vsel %vm962, %v965, %v968
    %v970 = vsel %vm960, nan, %v969
    %v971 = vand.u32 2147483647, %v208
    %vm972 = vcmp.le.f32.partialorder %v971, 0.7853982
    %vm973 = vcmp.lt.s32.totalorder %v208, 0
    %v974 = vand.u32 %v208, 2139095040
    %v975 = vshrl.u32 %v974, 23
    %v976 = vsub.s32 %v975, 127
    %v977 = vand.u32 2147483647, %v208
    %v978 = vand.u32 %v977, 8388607
    %v979 = vor.u32 %v978, 8388608
    %v980 = vsub.s32 0, %v979
    %v981 = vadd.s32 %v976, 1
    %vm982 = vcmp.gt.s32.totalorder %v981, 0
    %v983 = vsel %vm982, %v981, 0
    %v984 = vshrl.u32 %v983, 5
    %v985 = vand.u32 %v983, 31
    %v986 = vsub.s32 32, %v985
    %v987 = vshrl.u32 683565275, %v986
    %v988 = vshll.u32 683565275, %v985
    %v989 = vshrl.u32 2475754826, %v986
    %v990 = vor.u32 %v988, %v989
    %v991 = vshll.u32 2475754826, %v985
    %v992 = vshrl.u32 2131351028, %v986
    %v993 = vor.u32 %v991, %v992
    %v994 = vshll.u32 2131351028, %v985
    %v995 = vshrl.u32 2102212464, %v986
    %v996 = vor.u32 %v994, %v995
    %v997 = vshll.u32 2102212464, %v985
    %v998 = vshrl.u32 920167782, %v986
    %v999 = vor.u32 %v997, %v998
    %v1000 = vshll.u32 920167782, %v985
    %v1001 = vshrl.u32 1326507024, %v986
    %v1002 = vor.u32 %v1000, %v1001
    %vm1003 = vcmp.lt.s32.totalorder %v984, 1
    %vm1004 = vcmp.lt.s32.totalorder %v984, 2
    %vm1005 = vcmp.lt.s32.totalorder %v984, 3
    %vm1006 = vcmp.lt.s32.totalorder %v984, 4
    %v1007 = vsel %vm1003, %v987, %v990
    %v1008 = vsel %vm1006, %v996, 2102212464
    %v1009 = vsel %vm1005, %v993, %v1008
    %v1010 = vsel %vm1004, %v1007, %v1009
    %v1011 = vsel %vm1003, %v990, %v993
    %v1012 = vsel %vm1006, %v999, 920167782
    %v1013 = vsel %vm1005, %v996, %v1012
    %v1014 = vsel %vm1004, %v1011, %v1013
    %v1015 = vsel %vm1003, %v993, %v996
    %v1016 = vsel %vm1006, %v1002, 1326507024
    %v1017 = vsel %vm1005, %v999, %v1016
    %v1018 = vsel %vm1004, %v1015, %v1017
    %v1019 = vshll.u32 %v979, 8
    %v1020 = vmul.u32.u64.compose %v1019, %v1018
    %v1021 = vextract.low.u32 %v1020
    %v1022 = vextract.high.u32 %v1020
    %v1023 = vmul.u32.u64.compose %v1019, %v1014
    %v1024 = vextract.low.u32 %v1023
    %v1025 = vextract.high.u32 %v1023
    %v1026 = vmul.u32 %v1019, %v1010
    %v1027 = vadd.s32 %v1022, %v1024
    %vm1028 = vc.u32 %v1022, %v1024
    %v1029 = vadd.s32 %v1025, 1
    %v1030 = vsel %vm1028, %v1029, %v1025
    %v1031 = vadd.s32 %v1026, %v1030
    %v1032 = vadd.s32 %v1031, 536870912
    %v1033 = vshrl.u32 %v1032, 30
    %v1034 = vshll.u32 %v1033, 30
    %v1035 = vsub.s32 %v1031, %v1034
    %vm1036 = vcmp.lt.s32.totalorder %v1035, 0
    %v1037 = vsub.s32 0, %v1035
    %v1038 = vsel %vm1036, %v1037, %v1035
    %v1039 = vclz %v1038
    %v1040 = vsub.s32 %v1039, 2
    %vm1041 = vcmp.gt.s32.totalorder 0, %v1040
    %v1042 = vsel %vm1041, 0, %v1040
    %v1043 = vsub.s32 32, %v1042
    %v1044 = vshll.u32 %v1035, %v1042
    %v1045 = vshrl.u32 %v1027, %v1043
    %v1046 = vor.u32 %v1044, %v1045
    %v1047 = vsub.s32 4294967266, %v1042
    %v1048 = vadd.s32 %v1047, 127
    %v1049 = vshll.u32 %v1048, 23
    %v1050 = vor.u32 4788187, %v1049
    %v1051 = vand.u32 2147483647, %v1050
    %v1053 = vcvt.s32.f32 %v1046
    %v1054 = vmul.f32 %v1053, %v1051
    %v1055 = vxor.u32 %v1054, 2147483648
    %v1056 = vsel %vm973, %v1055, %v1054
    %v1057 = vsub.s32 4, %v1033
    %v1058 = vsel %vm973, %v1057, %v1033
    %v1059 = vsel %vm972, %v208, %v1056
    %v1060 = vsel %vm972, 0, %v1058
    %v1061 = vcosq.f32.pop %v1059
    %v1062 = vsinq.f32.pop %v1059
    %vm1063 = vweird.f32 %v208
    %v1064 = vand.u32 %v1060, 3
    %vm1065 = vcmp.lt.s32.totalorder %v1064, 2
    %vm1066 = vcmp.eq.s32.totalorder %v1064, 0
    %v1067 = vxor.u32 %v1062, 2147483648
    %v1068 = vsel %vm1066, %v1061, %v1067
    %vm1069 = vcmp.eq.s32.totalorder %v1064, 2
    %v1070 = vxor.u32 %v1061, 2147483648
    %v1071 = vsel %vm1069, %v1070, %v1062
    %v1072 = vsel %vm1065, %v1068, %v1071
    %v1073 = vsel %vm1063, nan, %v1072
    %v1074 = vmul.f32 %v764, %v651
    %v1075 = vmul.f32 %v867, %v651
    %v1076 = vmul.f32 %v970, %v655
    %v1077 = vmul.f32 %v1073, %v655
    %1078 = vxpose.xlu0.b32.start [1/16] %v658, 128
    %1079 = vxpose.xlu0.b32.cont [2/16] %v659, 128
    %1080 = vxpose.xlu0.b32.cont [3/16] %v1074, 128
    %1081 = vxpose.xlu0.b32.cont [4/16] %v1075, 128
    %1082 = vxpose.xlu0.b32.cont [5/16] 0.0, 128
    %1083 = vxpose.xlu0.b32.cont [6/16] 0.0, 128
    %1084 = vxpose.xlu0.b32.cont [7/16] 0.0, 128
    %1085 = vxpose.xlu0.b32.cont [8/16] 0.0, 128
    %1086 = vxpose.xlu0.b32.cont [9/16] 0.0, 128
    %1087 = vxpose.xlu0.b32.cont [10/16] 0.0, 128
    %1088 = vxpose.xlu0.b32.cont [11/16] 0.0, 128
    %1089 = vxpose.xlu0.b32.cont [12/16] 0.0, 128
    %1090 = vxpose.xlu0.b32.cont [13/16] 0.0, 128
    %1091 = vxpose.xlu0.b32.cont [14/16] 0.0, 128
    %1092 = vxpose.xlu0.b32.cont [15/16] 0.0, 128
    %1093 = vxpose.xlu0.b32.end [16/16] 0.0, 128
    %v1094 = vpop.trf.xlu0
    %v1095 = vpop.trf.xlu0
    %v1096 = vpop.trf.xlu0
    %v1097 = vpop.trf.xlu0
    %v1098 = vpop.trf.xlu0
    %v1099 = vpop.trf.xlu0
    %v1100 = vpop.trf.xlu0
    %v1101 = vpop.trf.xlu0
    %v1102 = vpop.trf.xlu0
    %v1103 = vpop.trf.xlu0
    %v1104 = vpop.trf.xlu0
    %v1105 = vpop.trf.xlu0
    %v1106 = vpop.trf.xlu0
    %v1107 = vpop.trf.xlu0
    %v1108 = vpop.trf.xlu0
    %v1109 = vpop.trf.xlu0
    %1110 = vxpose.xlu0.b32.start [1/16] %v660, 128
    %1111 = vxpose.xlu0.b32.cont [2/16] %v661, 128
    %1112 = vxpose.xlu0.b32.cont [3/16] %v1076, 128
    %1113 = vxpose.xlu0.b32.cont [4/16] %v1077, 128
    %1114 = vxpose.xlu0.b32.cont [5/16] 0.0, 128
    %1115 = vxpose.xlu0.b32.cont [6/16] 0.0, 128
    %1116 = vxpose.xlu0.b32.cont [7/16] 0.0, 128
    %1117 = vxpose.xlu0.b32.cont [8/16] 0.0, 128
    %1118 = vxpose.xlu0.b32.cont [9/16] 0.0, 128
    %1119 = vxpose.xlu0.b32.cont [10/16] 0.0, 128
    %1120 = vxpose.xlu0.b32.cont [11/16] 0.0, 128
    %1121 = vxpose.xlu0.b32.cont [12/16] 0.0, 128
    %1122 = vxpose.xlu0.b32.cont [13/16] 0.0, 128
    %1123 = vxpose.xlu0.b32.cont [14/16] 0.0, 128
    %1124 = vxpose.xlu0.b32.cont [15/16] 0.0, 128
    %1125 = vxpose.xlu0.b32.end [16/16] 0.0, 128
    %v1126 = vpop.trf.xlu0
    %v1127 = vpop.trf.xlu0
    %v1128 = vpop.trf.xlu0
    %v1129 = vpop.trf.xlu0
    %v1130 = vpop.trf.xlu0
    %v1131 = vpop.trf.xlu0
    %v1132 = vpop.trf.xlu0
    %v1133 = vpop.trf.xlu0
    %v1134 = vpop.trf.xlu0
    %v1135 = vpop.trf.xlu0
    %v1136 = vpop.trf.xlu0
    %v1137 = vpop.trf.xlu0
    %v1138 = vpop.trf.xlu0
    %v1139 = vpop.trf.xlu0
    %v1140 = vpop.trf.xlu0
    %v1141 = vpop.trf.xlu0
    %vm1142 = vcmask 261120
    %1143 = vst.msk [vmem:[%s3] sm:$0xff] %vm1142, %v1094
    %1144 = vst.msk [vmem:[%s3 + $0x8] sm:$0xff] %vm1142, %v1095
    %1145 = vst.msk [vmem:[%s3 + $0x10] sm:$0xff] %vm1142, %v1096
    %1146 = vst.msk [vmem:[%s3 + $0x18] sm:$0xff] %vm1142, %v1097
    %1147 = vst.msk [vmem:[%s3 + $0x20] sm:$0xff] %vm1142, %v1098
    %1148 = vst.msk [vmem:[%s3 + $0x28] sm:$0xff] %vm1142, %v1099
    %1149 = vst.msk [vmem:[%s3 + $0x30] sm:$0xff] %vm1142, %v1100
    %1150 = vst.msk [vmem:[%s3 + $0x38] sm:$0xff] %vm1142, %v1101
    %1151 = vst.msk [vmem:[%s3 + $0x40] sm:$0xff] %vm1142, %v1102
    %1152 = vst.msk [vmem:[%s3 + $0x48] sm:$0xff] %vm1142, %v1103
    %1153 = vst.msk [vmem:[%s3 + $0x50] sm:$0xff] %vm1142, %v1104
    %1154 = vst.msk [vmem:[%s3 + $0x58] sm:$0xff] %vm1142, %v1105
    %1155 = vst.msk [vmem:[%s3 + $0x60] sm:$0xff] %vm1142, %v1106
    %1156 = vst.msk [vmem:[%s3 + $0x68] sm:$0xff] %vm1142, %v1107
    %1157 = vst.msk [vmem:[%s3 + $0x70] sm:$0xff] %vm1142, %v1108
    %1158 = vst.msk [vmem:[%s3 + $0x78] sm:$0xff] %vm1142, %v1109
    %1159 = vst.msk [vmem:[%s3 + $0x80] sm:$0xff] %vm1142, %v1126
    %1160 = vst.msk [vmem:[%s3 + $0x88] sm:$0xff] %vm1142, %v1127
    %1161 = vst.msk [vmem:[%s3 + $0x90] sm:$0xff] %vm1142, %v1128
    %1162 = vst.msk [vmem:[%s3 + $0x98] sm:$0xff] %vm1142, %v1129
    %1163 = vst.msk [vmem:[%s3 + $0xa0] sm:$0xff] %vm1142, %v1130
    %1164 = vst.msk [vmem:[%s3 + $0xa8] sm:$0xff] %vm1142, %v1131
    %1165 = vst.msk [vmem:[%s3 + $0xb0] sm:$0xff] %vm1142, %v1132
    %1166 = vst.msk [vmem:[%s3 + $0xb8] sm:$0xff] %vm1142, %v1133
    %1167 = vst.msk [vmem:[%s3 + $0xc0] sm:$0xff] %vm1142, %v1134
    %1168 = vst.msk [vmem:[%s3 + $0xc8] sm:$0xff] %vm1142, %v1135
    %1169 = vst.msk [vmem:[%s3 + $0xd0] sm:$0xff] %vm1142, %v1136
    %1170 = vst.msk [vmem:[%s3 + $0xd8] sm:$0xff] %vm1142, %v1137
    %1171 = vst.msk [vmem:[%s3 + $0xe0] sm:$0xff] %vm1142, %v1138
    %1172 = vst.msk [vmem:[%s3 + $0xe8] sm:$0xff] %vm1142, %v1139
    %1173 = vst.msk [vmem:[%s3 + $0xf0] sm:$0xff] %vm1142, %v1140
    %1174 = vst.msk [vmem:[%s3 + $0xf8] sm:$0xff] %vm1142, %v1141
    // Predicated region
    $region22: #{tpu_custom_call.1} parent=1 // pred_check
      _
    $region23: #{tpu_custom_call.1} parent=1 // pred_check_branch
      %1176 = sbr.rel (0) target = $region25
    $region24: #{tpu_custom_call.1} parent=1 // pred_region
      _
    $region25: #{tpu_custom_call.1} parent=1 // pred_fallthru
      _
    // Predicated region
    $region26: #{tpu_custom_call.1} parent=1 // pred_check
      _
    $region27: #{tpu_custom_call.1} parent=1 // pred_check_branch
      %1178 = sbr.rel (0) target = $region29
    $region28: #{tpu_custom_call.1} parent=1 // pred_region
      _
    $region29: #{tpu_custom_call.1} parent=1 // pred_fallthru
      _
    %1179 = vsyncpa [#allocation4], 1

</llo_original>
